<compile_context>
chip_gen: v7x
topology: tpu7x:2x2x1
jax: 0.10.0
libtpu: 0.0.40
codegen_flags: <defaults>
</compile_context>

<pallas_src>
import functools

import jax
import jax.numpy as jnp
from jax.experimental import pallas as pl
from jax.experimental.pallas import tpu as pltpu


def _vmem_capacity_bytes():
    """Physical VMEM per TensorCore; conservative v7x fallback (64 MiB)."""
    try:
        info = pltpu.get_tpu_info()
        cap = getattr(info, "vmem_capacity_bytes", None)
        if cap:
            return int(cap)
    except Exception:
        pass
    return 64 * 1024 * 1024


def prepare_unembed_weight(w_u, compute_dtype=jnp.bfloat16):
    """Cast W_U to the compute dtype ONCE, outside the per-call path.

    Re-casting the full [d_model, d_vocab] weight on every call costs as much
    HBM traffic as the kernel itself; hoist it here (or store W_U in bf16).
    """
    if compute_dtype is None:
        return w_u
    cd = jnp.dtype(compute_dtype)
    return w_u if w_u.dtype == cd else w_u.astype(cd)


def _unembed_kernel(x_ref, w_ref, o_ref):
    # Single-shot matmul over the full d_model: result goes straight to the
    # output tile (f32 accumulation inside the MXU, cast on store).
    o_ref[...] = jnp.dot(
        x_ref[...], w_ref[...], preferred_element_type=jnp.float32
    ).astype(o_ref.dtype)


def _unembed_kernel_ksplit(x_ref, w_ref, o_ref, acc_ref):
    # Fallback for extremely large d_model: reduce over a K grid axis
    # (innermost), with an f32 accumulator.
    @pl.when(pl.program_id(2) == 0)
    def _():
        acc_ref[...] = jnp.zeros_like(acc_ref)

    acc_ref[...] += jnp.dot(
        x_ref[...], w_ref[...], preferred_element_type=jnp.float32
    )

    @pl.when(pl.program_id(2) == pl.num_programs(2) - 1)
    def _():
        o_ref[...] = acc_ref[...].astype(o_ref.dtype)


def _pick_tk(K, N, x_bytes, w_bytes, o_bytes, budget):
    """Keep the full reduction (W_U read from HBM exactly once) whenever a
    minimal full-K configuration fits the VMEM budget; only then split K."""
    tn_min = min(N, 128)
    tm_min = 8
    minimal = 2 * (
        tm_min * K * x_bytes + K * tn_min * w_bytes + tm_min * tn_min * o_bytes
    )
    if minimal <= budget:
        return K
    for cand in (8192, 4096, 2048, 1024, 512, 256, 128):
        if K % cand == 0 and cand < K:
            return cand
    return K  # pathological d_model: fall back to a full-K slab


def _pick_tiles(M, N, tk, x_bytes, w_bytes, o_bytes, budget):
    # Lane-dense vocab-tile candidates; prefer divisors of d_vocab so every
    # output store stays unmasked (no ragged last vocab tile).
    cands = [c for c in (2048, 1024, 512, 256, 128) if c <= N]
    if cands:
        divs = [c for c in cands if N % c == 0]
        tn_cands = divs if divs else cands
    else:
        tn_cands = [N]
    tn_cands = sorted(set(tn_cands), reverse=True)

    def need(tm_, tn_):
        # Conservative double-buffer accounting (x tile + W slab + out tile).
        return 2 * (tm_ * tk * x_bytes + tk * tn_ * w_bytes + tm_ * tn_ * o_bytes)

    # 1) Whole-M token tile: x's block index is constant across the grid, so
    #    the activations (like W_U) are DMA'd from HBM exactly once.
    for tn_ in tn_cands:
        if need(M, tn_) <= budget:
            return M, tn_

    # 2) Otherwise maximize the vocab tile first (x re-stream factor is
    #    cdiv(d_vocab, tn)), then the token tile.
    tm_cands = [c for c in (1024, 512, 256, 128, 64, 32, 16, 8) if c <= M]
    for tn_ in tn_cands:
        for tm_ in tm_cands:
            if need(tm_, tn_) <= budget:
                return tm_, tn_

    # 3) Nothing fits (pathological): smallest legal tiles; still correct.
    return (tm_cands[-1] if tm_cands else M), tn_cands[-1]


@functools.partial(
    jax.jit, static_argnames=("tm", "tn", "tk", "compute_dtype", "out_dtype")
)
def unembed(x, w_u, *, tm=None, tn=None, tk=None,
            compute_dtype=jnp.bfloat16, out_dtype=None):
    """x: [..., d_model]; w_u: [d_model, d_vocab] -> [..., d_vocab]."""
    *lead, d_model = x.shape
    d_model_w, d_vocab = w_u.shape
    assert d_model == d_model_w

    if out_dtype is None:
        out_dtype = jnp.promote_types(x.dtype, w_u.dtype)

    M = 1
    for d in lead:
        M *= d
    K, N = d_model, d_vocab
    x2d = x.reshape(M, K)

    if compute_dtype is not None:
        cd = jnp.dtype(compute_dtype)
        if x2d.dtype != cd:
            x2d = x2d.astype(cd)
        if w_u.dtype != cd:
            # For best perf pre-cast W_U once via prepare_unembed_weight();
            # this per-call cast re-reads the full weight through HBM.
            w_u = w_u.astype(cd)

    x_bytes = jnp.dtype(x2d.dtype).itemsize
    w_bytes = jnp.dtype(w_u.dtype).itemsize
    o_bytes = jnp.dtype(out_dtype).itemsize

    # Generation-aware VMEM plan (v5e/v6e: 128 MiB, v7x: 64 MiB per TC).
    cap = _vmem_capacity_bytes()
    budget = min(int(cap * 0.70), cap - (16 << 20))
    vmem_clamp = max(cap - (12 << 20), 32 << 20)

    tk = tk or _pick_tk(K, N, x_bytes, w_bytes, o_bytes, budget)
    auto_tm, auto_tn = _pick_tiles(M, N, tk, x_bytes, w_bytes, o_bytes, budget)
    tm = tm or auto_tm
    tn = tn or auto_tn

    n_tiles, m_tiles, k_tiles = pl.cdiv(N, tn), pl.cdiv(M, tm), pl.cdiv(K, tk)

    vmem_need = 2 * (tm * tk * x_bytes + tk * tn * w_bytes + tm * tn * o_bytes)
    if k_tiles > 1:
        vmem_need += tm * tn * 4  # f32 accumulator scratch
    vmem_limit = int(min(max(vmem_need + (8 << 20), 32 << 20), vmem_clamp))

    # Advisory only; accounts for the x re-stream when x is not resident.
    x_passes = n_tiles if m_tiles > 1 else 1
    cost = pl.CostEstimate(
        flops=2 * M * K * N,
        transcendentals=0,
        bytes_accessed=x_passes * M * K * x_bytes
        + K * N * w_bytes
        + M * N * o_bytes,
    )

    if k_tiles == 1:
        # Vocab (N) axis OUTER, token (M) axis INNER: the weight slab's block
        # index depends only on the outer index, so W_U is read from HBM
        # exactly once.  Only the vocab axis is marked "parallel" so megacore
        # (v7x) shards N — each core reads a disjoint half of W_U — rather
        # than duplicating the whole weight stream across cores.
        grid_spec = pltpu.PrefetchScalarGridSpec(
            num_scalar_prefetch=0,
            grid=(n_tiles, m_tiles),
            in_specs=[
                pl.BlockSpec((tm, tk), lambda j, i: (i, 0)),
                pl.BlockSpec((tk, tn), lambda j, i: (0, j)),
            ],
            out_specs=pl.BlockSpec((tm, tn), lambda j, i: (i, j)),
        )
        kernel = _unembed_kernel
        dim_sem = ("parallel", "arbitrary")
    else:
        grid_spec = pltpu.PrefetchScalarGridSpec(
            num_scalar_prefetch=0,
            grid=(n_tiles, m_tiles, k_tiles),
            in_specs=[
                pl.BlockSpec((tm, tk), lambda j, i, k: (i, k)),
                pl.BlockSpec((tk, tn), lambda j, i, k: (k, j)),
            ],
            out_specs=pl.BlockSpec((tm, tn), lambda j, i, k: (i, j)),
            scratch_shapes=[pltpu.VMEM((tm, tn), jnp.float32)],
        )
        kernel = _unembed_kernel_ksplit
        dim_sem = ("parallel", "arbitrary", "arbitrary")

    out2d = pl.pallas_call(
        kernel,
        out_shape=jax.ShapeDtypeStruct((M, N), out_dtype),
        grid_spec=grid_spec,
        compiler_params=pltpu.CompilerParams(
            dimension_semantics=dim_sem,
            vmem_limit_bytes=vmem_limit,
        ),
        cost_estimate=cost,
    )(x2d, w_u)

    return out2d.reshape(*lead, N)


if __name__ == "__main__":
    # Small shapes consistent with the module's forward.
    batch, seq, d_model, d_vocab = 2, 8, 32, 64

    key = jax.random.PRNGKey(0)
    kx, kw = jax.random.split(key)

    x = jax.random.normal(kx, (batch, seq, d_model), dtype=jnp.float32)
    # Deterministic init matching: torch.randn(d_model, d_vocab) / sqrt(d_vocab)
    w_u = jax.random.normal(kw, (d_model, d_vocab), dtype=jnp.float32) / jnp.sqrt(
        jnp.float32(d_vocab)
    )

    ref = x @ w_u

    # Exact-f32 path (reference semantics of the PyTorch module).
    out_f32 = jax.block_until_ready(unembed(x, w_u, compute_dtype=None))
    assert out_f32.shape == (batch, seq, d_vocab)
    assert jnp.allclose(out_f32, ref, atol=1e-5, rtol=1e-5)

    # Default fast path: bf16 MXU inputs, f32 accumulation, f32 output.
    # Weight is cast ONCE outside the per-call path.
    w_u_bf16 = prepare_unembed_weight(w_u)
    out_fast = jax.block_until_ready(unembed(x, w_u_bf16))
    assert out_fast.shape == (batch, seq, d_vocab)
    assert jnp.allclose(out_fast, ref, atol=2e-2, rtol=2e-2)

    print("KERNEL_OK")
</pallas_src>

<mosaic_0001>
module attributes {stable_mosaic.version = 11 : i64} {
  func.func @_unembed_kernel(%arg0: i32, %arg1: i32, %arg2: memref<16x32xf32, #tpu.memory_space<vmem>>, %arg3: memref<32x64xf32, #tpu.memory_space<vmem>>, %arg4: memref<16x64xf32, #tpu.memory_space<vmem>>) attributes {dimension_semantics = [#tpu.dimension_semantics<parallel>, #tpu.dimension_semantics<arbitrary>], iteration_bounds = array<i64: 1, 1>, scalar_prefetch = 0 : i64, scratch_operands = 0 : i64, tpu.core_type = #tpu.core_type<tc>, window_params = [{transform_indices = @transform_0, window_bounds = array<i64: 16, 32>}, {transform_indices = @transform_1, window_bounds = array<i64: 32, 64>}, {transform_indices = @transform_2, window_bounds = array<i64: 16, 64>}]} {
    %c0 = arith.constant 0 : index
    %c0_0 = arith.constant 0 : index
    %0 = vector.load %arg2[%c0, %c0_0] : memref<16x32xf32, #tpu.memory_space<vmem>>, vector<16x32xf32>
    %c0_1 = arith.constant 0 : index
    %c0_2 = arith.constant 0 : index
    %1 = vector.load %arg3[%c0_1, %c0_2] : memref<32x64xf32, #tpu.memory_space<vmem>>, vector<32x64xf32>
    %cst = arith.constant dense<0.000000e+00> : vector<16x64xf32>
    %2 = tpu.matmul %0, %1, %cst {dimension_numbers = #tpu.dot_dimension_numbers<[1], [0], [0], [1], [0, 0, 1, 1], [], []>} : vector<16x32xf32>, vector<32x64xf32>, vector<16x64xf32> -> vector<16x64xf32>
    %c0_3 = arith.constant 0 : index
    %c0_4 = arith.constant 0 : index
    %3 = vector.load %arg4[%c0_3, %c0_4] : memref<16x64xf32, #tpu.memory_space<vmem>>, vector<16x64xf32>
    tpu.vector_store %arg4[%c0_3, %c0_4], %2 {strides = array<i32>} : memref<16x64xf32, #tpu.memory_space<vmem>>, vector<16x64xf32>,
    return
  }
  func.func @transform_0(%arg0: i32, %arg1: i32) -> (i32, i32) {
    %c0_i32 = arith.constant 0 : i32
    %c0_i32_0 = arith.constant 0 : i32
    return %arg1, %c0_i32 : i32, i32
  }
  func.func @transform_1(%arg0: i32, %arg1: i32) -> (i32, i32) {
    %c0_i32 = arith.constant 0 : i32
    %c0_i32_0 = arith.constant 0 : i32
    return %c0_i32, %arg0 : i32, i32
  }
  func.func @transform_2(%arg0: i32, %arg1: i32) -> (i32, i32) {
    %c0_i32 = arith.constant 0 : i32
    return %arg1, %arg0 : i32, i32
  }
}

</mosaic_0001>

<llo_original>
// kernel: unembed.1
$region0: #{unembed.1}
  #allocation0 [shape = 'u32[]', space=smem, size = 0x4, offset = 0x4, fixed_abs, tag = 'smem constant byte address 0x4 - core index']
  #allocation1 [shape = 'u32[144,128]{1,0:T(1,128)}', space=vmem, size = 0x12000, scoped, tag = 'internal scratch']
  %s0 = inlined_call_operand.hbm [shape: f32[16,32], index: 0, kind: input, shape index: {}]
  %s1 = inlined_call_operand.hbm [shape: f32[32,64], index: 1, kind: input, shape index: {}]
  %s2 = inlined_call_operand.hbm [shape: f32[16,64], index: 2, kind: output, shape index: {}]
  %s3 = sld [smem:[#allocation0]]
  $region26: #{unembed.1} parent=0
    _
  %s5 = ssub.s32 1, %s3
  %s6 = scalar_select 0, %s5, %s3
  $region1: #{unembed.1} parent=0
    #allocation2 [shape = 'u8[8192]{0}', space=vmem, size = 0x2000, scoped, tag = 'input window, operand 0, single buffered']
    #allocation3 [shape = 's32[1]{0}', space=sflag, size = 0x4, scoped, tag = 'scoped memory for unembed.1']
    #allocation4 [shape = 's32[1]{0}', space=sflag, size = 0x4, scoped, tag = 'scoped memory for unembed.1']
    #allocation5 [shape = 'u8[16384]{0}', space=vmem, size = 0x4000, scoped, tag = 'input window, operand 1, single buffered']
    #allocation6 [shape = 's32[1]{0}', space=sflag, size = 0x4, scoped, tag = 'scoped memory for unembed.1']
    #allocation7 [shape = 'u8[8192]{0}', space=vmem, size = 0x2000, scoped, tag = 'output window, operand 0, single buffered']
    %7 = vsyncpa [#allocation3], 0
    %8 = vsyncpa [#allocation6], 0
    %9 = vsyncpa [#allocation4], 0
    // Predicated region
    $region2: #{unembed.1} parent=1 // pred_check
      _
    $region3: #{unembed.1} parent=1 // pred_check_branch
      %11 = sbr.rel (0) target = $region5
    $region4: #{unembed.1} parent=1 // pred_region
      %s13 = ssub.s32 256, 256
      %14 = vsyncadd [#allocation3], %s13
      %s15 = sshll.u32 [#allocation2], 4
      %s16 = int_to_ptr.vmem [resolvable:$true] %s15
      %21 = dma.hbm_to_vmem [thread:$0]  %s0, 256, %s16, [#allocation3], 128, 128, 8
    $region5: #{unembed.1} parent=1 // pred_fallthru
      _
    // Predicated region
    $region6: #{unembed.1} parent=1 // pred_check
      _
    $region7: #{unembed.1} parent=1 // pred_check_branch
      %23 = sbr.rel (0) target = $region9
    $region8: #{unembed.1} parent=1 // pred_region
      %s25 = ssub.s32 512, 512
      %26 = vsyncadd [#allocation6], %s25
      %s27 = sshll.u32 [#allocation5], 4
      %s28 = int_to_ptr.vmem [resolvable:$true] %s27
      %33 = dma.hbm_to_vmem [thread:$0]  %s1, 512, %s28, [#allocation6], 128, 128, 8
    $region9: #{unembed.1} parent=1 // pred_fallthru
      _
    // Predicated region
    $region10: #{unembed.1} parent=1 // pred_check
      _
    $region11: #{unembed.1} parent=1 // pred_check_branch
      %35 = sbr.rel (0) target = $region13
    $region12: #{unembed.1} parent=1 // pred_region
      %36 = dma.done [#allocation3], 256
    $region13: #{unembed.1} parent=1 // pred_fallthru
      _
    // Predicated region
    $region14: #{unembed.1} parent=1 // pred_check
      _
    $region15: #{unembed.1} parent=1 // pred_check_branch
      %38 = sbr.rel (0) target = $region17
    $region16: #{unembed.1} parent=1 // pred_region
      %39 = dma.done [#allocation6], 512
    $region17: #{unembed.1} parent=1 // pred_fallthru
      _
    %v40 = vld [vmem:[#allocation2] sm:$0xff]
    %v41 = vld [vmem:[#allocation2 + $0x8] sm:$0xff]
    %v42 = vld [vmem:[#allocation5] sm:$0xff]
    %v43 = vld [vmem:[#allocation5 + $0x8] sm:$0xff]
    %v44 = vld [vmem:[#allocation5 + $0x10] sm:$0xff]
    %v45 = vld [vmem:[#allocation5 + $0x18] sm:$0xff]
    %vm46 = vcmask 261120
    %v48 = vsel %vm46, %v40, 0
    %v51 = vsel %vm46, %v41, 0
    %53 = vmatprep.subr.mxu0 0.0
    %54 = vmatpush1.msra.mxu0 %v42
    %55 = vmatprep.subr.mxu0 0.0
    %56 = vmatpush1.msra.mxu0 %v43
    %57 = vmatprep.subr.mxu0 0.0
    %58 = vmatpush1.msra.mxu0 %v44
    %59 = vmatprep.subr.mxu0 0.0
    %60 = vmatpush1.msra.mxu0 %v45
    %61 = vmatprep.subr.mxu0 0.0
    %62 = vmatpush1.msra.mxu0 0.0
    %63 = vmatprep.subr.mxu0 0.0
    %64 = vmatpush1.msra.mxu0 0.0
    %65 = vmatprep.subr.mxu0 0.0
    %66 = vmatpush1.msra.mxu0 0.0
    %67 = vmatprep.subr.mxu0 0.0
    %68 = vmatpush1.msra.mxu0 0.0
    %69 = vmatprep.subr.mxu0 0.0
    %70 = vmatpush1.msra.mxu0 0.0
    %71 = vmatprep.subr.mxu0 0.0
    %72 = vmatpush1.msra.mxu0 0.0
    %73 = vmatprep.subr.mxu0 0.0
    %74 = vmatpush1.msra.mxu0 0.0
    %75 = vmatprep.subr.mxu0 0.0
    %76 = vmatpush1.msra.mxu0 0.0
    %77 = vmatprep.subr.mxu0 0.0
    %78 = vmatpush1.msra.mxu0 0.0
    %79 = vmatprep.subr.mxu0 0.0
    %80 = vmatpush1.msra.mxu0 0.0
    %81 = vmatprep.subr.mxu0 0.0
    %82 = vmatpush1.msra.mxu0 0.0
    %83 = vmatprep.subr.mxu0 0.0
    %84 = vmatpush1.msra.mxu0 0.0
    %85 = vmatprep.subr.mxu0 0.0
    %86 = vmatpush1.msra.mxu0 0.0
    %87 = vmatprep.subr.mxu0 0.0
    %88 = vmatpush1.msra.mxu0 0.0
    %89 = vmatprep.subr.mxu0 0.0
    %90 = vmatpush1.msra.mxu0 0.0
    %91 = vmatprep.subr.mxu0 0.0
    %92 = vmatpush1.msra.mxu0 0.0
    %93 = vmatprep.subr.mxu0 0.0
    %94 = vmatpush1.msra.mxu0 0.0
    %95 = vmatprep.subr.mxu0 0.0
    %96 = vmatpush1.msra.mxu0 0.0
    %97 = vmatprep.subr.mxu0 0.0
    %98 = vmatpush1.msra.mxu0 0.0
    %99 = vmatprep.subr.mxu0 0.0
    %100 = vmatpush1.msra.mxu0 0.0
    %101 = vmatprep.subr.mxu0 0.0
    %102 = vmatpush1.msra.mxu0 0.0
    %103 = vmatprep.subr.mxu0 0.0
    %104 = vmatpush1.msra.mxu0 0.0
    %105 = vmatprep.subr.mxu0 0.0
    %106 = vmatpush1.msra.mxu0 0.0
    %107 = vmatprep.subr.mxu0 0.0
    %108 = vmatpush1.msra.mxu0 0.0
    %109 = vmatprep.subr.mxu0 0.0
    %110 = vmatpush1.msra.mxu0 0.0
    %111 = vmatprep.subr.mxu0 0.0
    %112 = vmatpush1.msra.mxu0 0.0
    %113 = vmatprep.subr.mxu0 0.0
    %114 = vmatpush1.msra.mxu0 0.0
    %115 = vmatprep.subr.mxu0 0.0
    %116 = vmatpush1.msra.mxu0 0.0
    %117 = vmatprep.mubr.f32.mxu0 0.0
    %118 = vmatmul.mubr.f32.gmra.mrb[0].mxu0 %v48
    %v119 = vpop.f32.mrb[0].mxu0
    %v120 = vadd.f32 0.0, %v119
    %v121 = vpop.f32.mrb[0].mxu0
    %122 = vmatprep.mubr.f32.mxu0 0.0
    %123 = vmatmul.mubr.f32.gmra.mrb[0].mxu0 %v51
    %v124 = vpop.f32.mrb[0].mxu0
    %v125 = vadd.f32 0.0, %v124
    %v126 = vpop.f32.mrb[0].mxu0
    %127 = vdwg.mxu0
    %vm128 = vcmask 523264
    %129 = vst.msk [vmem:[#allocation7] sm:$0xff] %vm128, %v120
    %130 = vst.msk [vmem:[#allocation7 + $0x8] sm:$0xff] %vm128, %v125
    // Predicated region
    $region18: #{unembed.1} parent=1 // pred_check
      _
    $region19: #{unembed.1} parent=1 // pred_check_branch
      %132 = sbr.rel (0) target = $region21
    $region20: #{unembed.1} parent=1 // pred_region
      %s134 = ssub.s32 256, 256
      %135 = vsyncadd [#allocation4], %s134
      %s136 = sshll.u32 [#allocation7], 4
      %s137 = int_to_ptr.vmem [resolvable:$true] %s136
      %142 = dma.vmem_to_hbm [thread:$0]  %s137, 256, %s2, [#allocation4], 128, 128, 8
    $region21: #{unembed.1} parent=1 // pred_fallthru
      _
    // Predicated region
    $region22: #{unembed.1} parent=1 // pred_check
      _
    $region23: #{unembed.1} parent=1 // pred_check_branch
      %144 = sbr.rel (0) target = $region25
    $region24: #{unembed.1} parent=1 // pred_region
      %145 = dma.done [#allocation4], 256
    $region25: #{unembed.1} parent=1 // pred_fallthru
      _
    %146 = vsyncpa [#allocation3], 1
    %147 = vsyncpa [#allocation6], 1
    %148 = vsyncpa [#allocation4], 1

</llo_original>
